<compile_context>
chip_gen: v6e
topology: v6e:2x2x1
jax: 0.10.0
libtpu: 0.0.40
codegen_flags: <defaults>
</compile_context>

<pallas_src>
import functools

import jax
import jax.numpy as jnp
from jax.experimental import pallas as pl
from jax.experimental.pallas import tpu as pltpu


def _round_up(a: int, b: int) -> int:
    return ((a + b - 1) // b) * b


def _pick_col_tile(S: int, max_cols: int) -> int:
    """Full extent if it fits; otherwise a multiple of 128 sized so the last
    (masked / clipped) tile over-reads as little as possible."""
    if S <= max_cols:
        return S
    s128 = _round_up(S, 128)
    n = pl.cdiv(s128, max_cols)
    return min(max_cols, _round_up(pl.cdiv(s128, n), 128))


def _vmem_limit(need_bytes: int) -> int:
    """~2x headroom over the computed need, at least 32 MiB (raises v5e's
    16 MiB scoped default), capped at 48 MiB (v7x has 64 MiB per TC)."""
    return int(min(48 << 20, max(32 << 20, 2 * need_bytes)))


# ----------------------------------------------------------- pass 1: avg-pool
def _pool_sum_kernel(x_ref, sum_ref, acc_ref, *, true_s):
    # x_ref:   (row_tile, col_tile) activation tile.
    # sum_ref: (row_tile, 1) f32 output block, resident across the k axis.
    # acc_ref: (row_tile, 128) f32 scratch: per-lane partial sums, so the hot
    #          loop is pure VPU adds; cross-lane reduce + narrow store happen
    #          once per row tile.
    k = pl.program_id(1)
    n_k = pl.num_programs(1)
    col_tile = x_ref.shape[1]

    @pl.when(k == 0)
    def _():
        acc_ref[...] = jnp.zeros_like(acc_ref)

    x = x_ref[...].astype(jnp.float32)

    if true_s % col_tile != 0:
        # Unpadded slab: the last column tile overhangs the true spatial
        # extent -> zero the garbage lanes before accumulating.  (Only the
        # tail tile has any, but the mask is cheap VPU work hidden under the
        # tile DMA.)
        col = k * col_tile + jax.lax.broadcasted_iota(jnp.int32, x.shape, 1)
        x = jnp.where(col < true_s, x, 0.0)

    if col_tile % 128 == 0:
        # Fold this tile's lanes into 128 running partial sums with static,
        # lane-aligned slices (pure VPU adds, no XLU in the hot loop).
        part = x[:, 0:128]
        for c0 in range(128, col_tile, 128):
            part = part + x[:, c0:c0 + 128]
        acc_ref[...] += part

        @pl.when(k == n_k - 1)
        def _():
            sum_ref[...] = jnp.sum(acc_ref[...], axis=-1, keepdims=True)
    else:
        # col_tile == S (single full-extent tile, S < 128-aligned tiling):
        # n_k == 1, reduce and store directly.
        sum_ref[...] = jnp.sum(x, axis=-1, keepdims=True)


# --------------------------------------------------------------- pass 2: scale
def _scale_kernel(x_ref, gate_ref, o_ref):
    # x_ref: (row_tile, col_tile); gate_ref: (row_tile, 1) broadcasts over
    # lanes.  Tail (out-of-bounds) reads are multiplied and then dropped by
    # the clipped writeback, so no mask is needed here.
    o_ref[...] = (x_ref[...] * gate_ref[...]).astype(o_ref.dtype)


def se_block(x, w1_t, w2_t, *, row_tile_max=512, donate_x=False):
    """x: (B, C, H, W); w1_t: (C, C_red); w2_t: (C_red, C) -> (B, C, H, W).

    w1_t / w2_t are the PyTorch fc weights pre-transposed to (in, out) layout
    so the excitation is a plain `pooled @ W`.
    """
    B, C, H, W = x.shape
    R, S = B * C, H * W
    itemsize = jnp.dtype(x.dtype).itemsize
    sublane_min = max(8, 32 // itemsize)     # 8 (f32) / 16 (bf16) / 32 (int8)

    x2d = x.reshape(R, S)                    # row-major reshape: free, no copy

    # Rows: dtype-aware sublane alignment; aim for >= 2 row blocks so both
    # v7x TensorCores get work on the "parallel" rows axis.
    if R <= sublane_min:
        row_tile = sublane_min
    else:
        row_tile = min(row_tile_max, _round_up(pl.cdiv(R, 2), sublane_min))
    n_rows = pl.cdiv(R, row_tile)

    # Columns: size tiles by bytes.  Pass 1 only double-buffers its input
    # (its (row_tile,1) output is a resident accumulator) so it gets ~2x the
    # read-tile size of the scale pass under the same VMEM budget.
    def _col_max(tile_bytes):
        return max(256, (tile_bytes // (row_tile * itemsize)) // 128 * 128)

    ct_pool = _pick_col_tile(S, _col_max(8 << 20))    # ~8 MiB read tiles
    ct_scale = _pick_col_tile(S, _col_max(4 << 20))   # ~4 MiB in + 4 MiB out
    n_cols_pool = pl.cdiv(S, ct_pool)
    n_cols_scale = pl.cdiv(S, ct_scale)

    gate_blk_bytes = row_tile * 128 * 4   # (row_tile, 1) f32, lane-padded

    # ---- pass 1: tiled global spatial sum -----------------------------------
    vmem_pool = 2 * row_tile * ct_pool * itemsize + 3 * gate_blk_bytes
    sums = pl.pallas_call(
        functools.partial(_pool_sum_kernel, true_s=S),
        out_shape=jax.ShapeDtypeStruct((R, 1), jnp.float32),
        grid=(n_rows, n_cols_pool),
        in_specs=[pl.BlockSpec((row_tile, ct_pool), lambda i, k: (i, k))],
        out_specs=pl.BlockSpec((row_tile, 1), lambda i, k: (i, 0)),
        scratch_shapes=[pltpu.VMEM((row_tile, 128), jnp.float32)],
        compiler_params=pltpu.CompilerParams(
            dimension_semantics=("parallel", "arbitrary"),
            vmem_limit_bytes=_vmem_limit(vmem_pool)),
        cost_estimate=pl.CostEstimate(
            flops=R * S, transcendentals=0,
            bytes_accessed=R * S * itemsize + R * 4),
    )(x2d)

    # ---- excitation gate: tiny, done in plain jnp (no pallas_call) ----------
    pooled = sums.reshape(B, C) * (1.0 / float(S))            # mean, f32
    h = jnp.maximum(pooled @ w1_t.astype(jnp.float32), 0.0)
    gate = jax.nn.sigmoid(h @ w2_t.astype(jnp.float32))
    gate_col = gate.reshape(R, 1)                             # free reshape

    # ---- pass 2: tiled channel-wise rescale ----------------------------------
    vmem_scale = 4 * row_tile * ct_scale * itemsize + 2 * gate_blk_bytes
    out2d = pl.pallas_call(
        _scale_kernel,
        out_shape=jax.ShapeDtypeStruct((R, S), x.dtype),
        grid=(n_rows, n_cols_scale),
        in_specs=[
            pl.BlockSpec((row_tile, ct_scale), lambda i, j: (i, j)),
            pl.BlockSpec((row_tile, 1), lambda i, j: (i, 0)),
        ],
        out_specs=pl.BlockSpec((row_tile, ct_scale), lambda i, j: (i, j)),
        input_output_aliases=({0: 0} if donate_x else {}),
        compiler_params=pltpu.CompilerParams(
            dimension_semantics=("parallel", "parallel"),
            vmem_limit_bytes=_vmem_limit(vmem_scale)),
        cost_estimate=pl.CostEstimate(
            flops=R * S, transcendentals=0,
            bytes_accessed=2 * R * S * itemsize + R * 4),
    )(x2d, gate_col)

    return out2d.reshape(B, C, H, W)                          # free reshape


def se_block_reference(x, w1_t, w2_t):
    """Pure-JAX reference mirroring the PyTorch forward."""
    pooled = jnp.mean(x, axis=(2, 3))                         # (B, C)
    h = jnp.maximum(pooled @ w1_t, 0.0)                       # (B, C_red)
    s = jax.nn.sigmoid(h @ w2_t)                              # (B, C)
    return x * s[:, :, None, None]


if __name__ == "__main__":
    # Module config: in_channels == out_channels (required for expand_as),
    # reduction = 1.
    B, C, H, W = 2, 4, 16, 16
    reduction = 1
    C_red = C // reduction

    key = jax.random.PRNGKey(0)
    kx, k1, k2 = jax.random.split(key, 3)

    x = jax.random.normal(kx, (B, C, H, W), dtype=jnp.float32)

    # PyTorch nn.Linear stores weight as (out_features, in_features); we keep
    # the pre-transposed (in, out) layout so the excitation is plain x @ W.
    w1_t = jax.random.normal(k1, (C, C_red), dtype=jnp.float32) * 0.1  # fc1.weight.T
    w2_t = jax.random.normal(k2, (C_red, C), dtype=jnp.float32) * 0.1  # fc2.weight.T

    out = jax.block_until_ready(se_block(x, w1_t, w2_t))

    ref = se_block_reference(x, w1_t, w2_t)
    assert out.shape == (B, C, H, W)
    assert jnp.allclose(out, ref, atol=1e-5, rtol=1e-5), "mismatch vs reference"

    print("KERNEL_OK")
</pallas_src>

<mosaic_0001>
module attributes {stable_mosaic.version = 11 : i64} {
  func.func @_pool_sum_kernel(%arg0: i32, %arg1: i32, %arg2: memref<8x256xf32, #tpu.memory_space<vmem>>, %arg3: memref<8x1xf32, #tpu.memory_space<vmem>>, %arg4: memref<8x128xf32, #tpu.memory_space<vmem>>) attributes {dimension_semantics = [#tpu.dimension_semantics<parallel>, #tpu.dimension_semantics<arbitrary>], iteration_bounds = array<i64: 1, 1>, scalar_prefetch = 0 : i64, scratch_operands = 1 : i64, tpu.core_type = #tpu.core_type<tc>, window_params = [{transform_indices = @transform_0, window_bounds = array<i64: 8, 256>}, {transform_indices = @transform_1, window_bounds = array<i64: 8, 1>}]} {
    %c0_i32 = arith.constant 0 : i32
    %0 = arith.cmpi eq, %arg1, %c0_i32 : i32
    %1 = arith.extui %0 : i1 to i32
    %c0_i32_0 = arith.constant 0 : i32
    %2 = arith.cmpi ne, %1, %c0_i32_0 : i32
    scf.if %2 {
      %cst = arith.constant 0.000000e+00 : f32
      %13 = vector.broadcast %cst : f32 to vector<8x128xf32>
      %c0_8 = arith.constant 0 : index
      %c0_9 = arith.constant 0 : index
      %14 = vector.load %arg4[%c0_8, %c0_9] : memref<8x128xf32, #tpu.memory_space<vmem>>, vector<8x128xf32>
      tpu.vector_store %arg4[%c0_8, %c0_9], %13 {strides = array<i32>} : memref<8x128xf32, #tpu.memory_space<vmem>>, vector<8x128xf32>,
    } else {
    }
    %c0 = arith.constant 0 : index
    %c0_1 = arith.constant 0 : index
    %3 = vector.load %arg2[%c0, %c0_1] : memref<8x256xf32, #tpu.memory_space<vmem>>, vector<8x256xf32>
    %4 = vector.extract_strided_slice %3 {offsets = [0, 0], sizes = [8, 128], strides = [1, 1]} : vector<8x256xf32> to vector<8x128xf32>
    %5 = vector.extract_strided_slice %3 {offsets = [0, 128], sizes = [8, 128], strides = [1, 1]} : vector<8x256xf32> to vector<8x128xf32>
    %6 = arith.addf %4, %5 : vector<8x128xf32>
    %c0_2 = arith.constant 0 : index
    %c0_3 = arith.constant 0 : index
    %7 = vector.load %arg4[%c0_2, %c0_3] : memref<8x128xf32, #tpu.memory_space<vmem>>, vector<8x128xf32>
    %8 = arith.addf %7, %6 : vector<8x128xf32>
    %c0_4 = arith.constant 0 : index
    %c0_5 = arith.constant 0 : index
    %9 = vector.load %arg4[%c0_4, %c0_5] : memref<8x128xf32, #tpu.memory_space<vmem>>, vector<8x128xf32>
    tpu.vector_store %arg4[%c0_4, %c0_5], %8 {strides = array<i32>} : memref<8x128xf32, #tpu.memory_space<vmem>>, vector<8x128xf32>,
    %c0_i32_6 = arith.constant 0 : i32
    %10 = arith.cmpi eq, %arg1, %c0_i32_6 : i32
    %11 = arith.extui %10 : i1 to i32
    %c0_i32_7 = arith.constant 0 : i32
    %12 = arith.cmpi ne, %11, %c0_i32_7 : i32
    scf.if %12 {
      %c0_8 = arith.constant 0 : index
      %c0_9 = arith.constant 0 : index
      %13 = vector.load %arg4[%c0_8, %c0_9] : memref<8x128xf32, #tpu.memory_space<vmem>>, vector<8x128xf32>
      %cst = arith.constant dense<0.000000e+00> : vector<8xf32>
      %14 = vector.multi_reduction <add>, %13, %cst [1] : vector<8x128xf32> to vector<8xf32>
      %15 = vector.shape_cast %14 : vector<8xf32> to vector<8x1xf32>
      %c0_10 = arith.constant 0 : index
      %c0_11 = arith.constant 0 : index
      %16 = vector.load %arg3[%c0_10, %c0_11] : memref<8x1xf32, #tpu.memory_space<vmem>>, vector<8x1xf32>
      tpu.vector_store %arg3[%c0_10, %c0_11], %15 {strides = array<i32>} : memref<8x1xf32, #tpu.memory_space<vmem>>, vector<8x1xf32>,
    } else {
    }
    return
  }
  func.func @transform_0(%arg0: i32, %arg1: i32) -> (i32, i32) {
    %c0_i32 = arith.constant 0 : i32
    return %arg0, %arg1 : i32, i32
  }
  func.func @transform_1(%arg0: i32, %arg1: i32) -> (i32, i32) {
    %c0_i32 = arith.constant 0 : i32
    %c0_i32_0 = arith.constant 0 : i32
    return %arg0, %c0_i32 : i32, i32
  }
}

</mosaic_0001>

<llo_original>
// kernel: tpu_custom_call.1
$region0: #{tpu_custom_call.1}
  #allocation0 [shape = 'u32[]', space=smem, size = 0x4, offset = 0x4, fixed_abs, tag = 'smem constant byte address 0x4 - core index']
  #allocation1 [shape = 'u32[144,128]{1,0:T(1,128)}', space=vmem, size = 0x12000, scoped, tag = 'internal scratch']
  #allocation2 [shape = 'f32[8,128]{1,0:T(8,128)}', space=vmem, size = 0x1000, scoped, tag = 'scratch operand']
  %s0 = inlined_call_operand.hbm [shape: f32[8,256], index: 0, kind: input, shape index: {}]
  %s1 = inlined_call_operand.vmem [shape: f32[8,1], index: 1, kind: output, shape index: {}]
  %s2 = sld [smem:[#allocation0]]
  $region26: #{tpu_custom_call.1} parent=0
    _
  %s4 = ssub.s32 1, %s2
  %s5 = scalar_select 0, %s4, %s2
  $region1: #{tpu_custom_call.1} parent=0
    #allocation3 [shape = 'u8[8192]{0}', space=vmem, size = 0x2000, scoped, tag = 'input window, operand 0, single buffered']
    #allocation4 [shape = 's32[1]{0}', space=sflag, size = 0x4, scoped, tag = 'scoped memory for tpu_custom_call.1']
    %6 = vsyncpa [#allocation4], 0
    // Predicated region
    $region2: #{tpu_custom_call.1} parent=1 // pred_check
      _
    $region3: #{tpu_custom_call.1} parent=1 // pred_check_branch
      %8 = sbr.rel (0) target = $region5
    $region4: #{tpu_custom_call.1} parent=1 // pred_region
      %s10 = ssub.s32 256, 256
      %11 = vsyncadd [#allocation4], %s10
      %s13 = sshll.u32 [#allocation3], 4
      %s14 = int_to_ptr.vmem [resolvable:$true] %s13
      %16 = dma.hbm_to_vmem [thread:$0]  %s0, 256, %s14, [#allocation4]
    $region5: #{tpu_custom_call.1} parent=1 // pred_fallthru
      _
    // Predicated region
    $region6: #{tpu_custom_call.1} parent=1 // pred_check
      _
    $region7: #{tpu_custom_call.1} parent=1 // pred_check_branch
      %18 = sbr.rel (0) target = $region9
    $region8: #{tpu_custom_call.1} parent=1 // pred_region
      %19 = dma.done [#allocation4], 256
    $region9: #{tpu_custom_call.1} parent=1 // pred_fallthru
      _
    %p20 = scmp.eq.s32.totalorder 0, 0
    // Predicated region
    $region10: #{tpu_custom_call.1} parent=1 // pred_check
      %p21 = pneg %p20
    $region11: #{tpu_custom_call.1} parent=1 // pred_check_branch
      %23 = sbr.rel (%p21) target = $region13
    $region12: #{tpu_custom_call.1} parent=1 // pred_region
      %24 = vst [vmem:[#allocation2] sm:$0xff] 0.0
    $region13: #{tpu_custom_call.1} parent=1 // pred_fallthru
      _
    %v25 = vld [vmem:[#allocation3] sm:$0xff]
    %v26 = vld [vmem:[#allocation3 + $0x8] sm:$0xff]
    %v27 = vadd.f32 %v25, %v26
    %v28 = vld [vmem:[#allocation2] sm:$0xff]
    %v29 = vadd.f32 %v28, %v27
    %30 = vst [vmem:[#allocation2] sm:$0xff] %v29
    // Predicated region
    $region14: #{tpu_custom_call.1} parent=1 // pred_check
      %p31 = pneg %p20
    $region15: #{tpu_custom_call.1} parent=1 // pred_check_branch
      %33 = sbr.rel (%p31) target = $region17
    $region16: #{tpu_custom_call.1} parent=1 // pred_region
      %v34 = vld [vmem:[#allocation2] sm:$0xff]
      %35 = vadd.xlane.f32.xlu0 %v34
      %v36 = vpop.xlane.xlu0 %35
      %vm37 = vcmask 7168
      %38 = vst.msk [vmem:[%s1] sm:$0xff] %vm37, %v36
    $region17: #{tpu_custom_call.1} parent=1 // pred_fallthru
      _
    // Predicated region
    $region18: #{tpu_custom_call.1} parent=1 // pred_check
      _
    $region19: #{tpu_custom_call.1} parent=1 // pred_check_branch
      %40 = sbr.rel (0) target = $region21
    $region20: #{tpu_custom_call.1} parent=1 // pred_region
      _
    $region21: #{tpu_custom_call.1} parent=1 // pred_fallthru
      _
    // Predicated region
    $region22: #{tpu_custom_call.1} parent=1 // pred_check
      _
    $region23: #{tpu_custom_call.1} parent=1 // pred_check_branch
      %42 = sbr.rel (0) target = $region25
    $region24: #{tpu_custom_call.1} parent=1 // pred_region
      _
    $region25: #{tpu_custom_call.1} parent=1 // pred_fallthru
      _
    %43 = vsyncpa [#allocation4], 1

</llo_original>
